<compile_context>
chip_gen: v7x
topology: tpu7x:2x2x1
jax: 0.10.0
libtpu: 0.0.40
codegen_flags: <defaults>
</compile_context>

<pallas_src>
import functools

import jax
import jax.numpy as jnp
from jax.experimental import pallas as pl
from jax.experimental.pallas import tpu as pltpu


# Mirrors the missing Config.hidden_sizes in the PyTorch source.
HIDDEN_SIZES = (32, 32)
_DEFAULT_BATCH_TILE = 2048  # lane-axis tile; multiple of 128


def _policy_mlp_kernel(x_ref, w1_ref, b1_ref, w2_ref, b2_ref, w3_ref, b3_ref,
                       oT_ref):
    """x_ref: [TB, in] (native layout), W_i: [out_i, in_i], b_i: [out_i, 1].

    Computes oT = tanh(W3 @ relu(W2 @ relu(W1 @ x^T + b1) + b2) + b3),
    shape [out_dim, TB] with the batch tile lane-dense.
    """
    xT = x_ref[...].T  # XLU transpose: batch -> lanes (lane-dense from here on)
    # Layer 1: Linear + ReLU (f32 MXU accumulation, f32 elementwise)
    h = jnp.dot(w1_ref[...], xT, preferred_element_type=jnp.float32)
    h = jnp.maximum(h + b1_ref[...], 0.0)
    # Layer 2: Linear + ReLU
    h = jnp.dot(w2_ref[...], h.astype(w2_ref.dtype),
                preferred_element_type=jnp.float32)
    h = jnp.maximum(h + b2_ref[...], 0.0)
    # Layer 3: Linear + Tanh (tanh stays f32, runs on the EUP)
    h = jnp.dot(w3_ref[...], h.astype(w3_ref.dtype),
                preferred_element_type=jnp.float32)
    oT_ref[...] = jnp.tanh(h + b3_ref[...]).astype(oT_ref.dtype)


def prepare_policy_params(params, compute_dtype=jnp.float32):
    """One-time weight prep, hoisted out of the per-call path.

    Weights stay in torch layout [out, in] (exactly what the lane-dense kernel
    wants), cast once to the MXU streaming dtype.  Biases become [out, 1] f32
    for lane-broadcast inside the kernel.  Use compute_dtype=jnp.bfloat16 on
    v6e/v7x (and for DMA/MXU on v5e) to halve the streamed bytes.
    """
    return {
        "w1": params["w1"].astype(compute_dtype),
        "w2": params["w2"].astype(compute_dtype),
        "w3": params["w3"].astype(compute_dtype),
        "b1": params["b1"].reshape(-1, 1).astype(jnp.float32),
        "b2": params["b2"].reshape(-1, 1).astype(jnp.float32),
        "b3": params["b3"].reshape(-1, 1).astype(jnp.float32),
    }


def policy_nn_forward(state, prepared, *, batch_tile=_DEFAULT_BATCH_TILE,
                      transposed_output=False, min_pallas_batch=0,
                      core_parallel=False):
    """state: [B, input_state].  prepared: output of prepare_policy_params.

    Returns actions [B, output_action] f32 (or [output_action, B] lane-dense
    when transposed_output=True, skipping the trailing XLA transpose).
    """
    w1, w2, w3 = prepared["w1"], prepared["w2"], prepared["w3"]
    b1, b2, b3 = prepared["b1"], prepared["b2"], prepared["b3"]
    compute_dtype = w1.dtype

    B = state.shape[0]
    in_dim = w1.shape[1]
    h0, h1 = w1.shape[0], w2.shape[0]
    out_dim = w3.shape[0]

    # No-op when the caller already stores states in the streaming dtype.
    x = state.astype(compute_dtype)

    # Tiny-batch fast path: XLA fuses this 3-layer MLP fine and avoids the
    # fixed pallas_call overhead.  Disabled by default (min_pallas_batch=0).
    if B < min_pallas_batch:
        h = jnp.maximum(x @ w1.T + b1[:, 0], 0.0)
        h = jnp.maximum(h.astype(compute_dtype) @ w2.T + b2[:, 0], 0.0)
        o = jnp.tanh(h.astype(compute_dtype) @ w3.T + b3[:, 0])
        o = o.astype(jnp.float32)
        return o.T if transposed_output else o

    if B <= batch_tile:
        tb = B  # single full-array block (bypasses the (8,128) rule)
    else:
        tb = max(128, (batch_tile // 128) * 128)  # lane tiles must be 128-aligned
    grid = (pl.cdiv(B, tb),)

    flops = 2 * B * (in_dim * h0 + h0 * h1 + h1 * out_dim)
    bytes_accessed = int(
        x.size * x.dtype.itemsize
        + sum(int(p.size) * p.dtype.itemsize for p in (w1, w2, w3, b1, b2, b3))
        + B * out_dim * 4)

    def full_block(arr):
        # Grid-invariant block: stays VMEM-resident across all batch steps.
        # (~7 KiB total; needs no double-buffering.)
        return pl.BlockSpec(arr.shape, lambda i: (0, 0))

    dim_sem = (pltpu.CORE_PARALLEL,) if core_parallel else ("parallel",)

    oT = pl.pallas_call(
        _policy_mlp_kernel,
        out_shape=jax.ShapeDtypeStruct((out_dim, B), jnp.float32),
        grid=grid,
        in_specs=[
            pl.BlockSpec((tb, in_dim), lambda i: (i, 0)),  # state, native layout
            full_block(w1), full_block(b1),
            full_block(w2), full_block(b2),
            full_block(w3), full_block(b3),
        ],
        out_specs=pl.BlockSpec((out_dim, tb), lambda i: (0, i)),
        compiler_params=pltpu.CompilerParams(dimension_semantics=dim_sem),
        cost_estimate=pl.CostEstimate(
            flops=flops,
            transcendentals=B * out_dim,
            bytes_accessed=bytes_accessed),
    )(x, w1, b1, w2, b2, w3, b3)

    return oT if transposed_output else oT.T


def init_policy_params(key, input_state, output_action,
                       hidden_sizes=HIDDEN_SIZES):
    """Deterministic synthetic init (torch nn.Linear layout: W [out, in])."""
    h0, h1 = hidden_sizes
    ks = jax.random.split(key, 6)

    def lin(kw, kb, fan_in, fan_out):
        bound = 1.0 / jnp.sqrt(jnp.float32(fan_in))
        w = jax.random.uniform(kw, (fan_out, fan_in), jnp.float32,
                               minval=-bound, maxval=bound)
        b = jax.random.uniform(kb, (fan_out,), jnp.float32,
                               minval=-bound, maxval=bound)
        return w, b

    w1, b1 = lin(ks[0], ks[1], input_state, h0)
    w2, b2 = lin(ks[2], ks[3], h0, h1)
    w3, b3 = lin(ks[4], ks[5], h1, output_action)
    return {"w1": w1, "b1": b1, "w2": w2, "b2": b2, "w3": w3, "b3": b3}


def _reference_forward(state, params):
    h = jnp.maximum(state @ params["w1"].T + params["b1"], 0.0)
    h = jnp.maximum(h @ params["w2"].T + params["b2"], 0.0)
    return jnp.tanh(h @ params["w3"].T + params["b3"])


if __name__ == "__main__":
    key = jax.random.PRNGKey(0)
    k_param, k_state, k_big = jax.random.split(key, 3)

    batch = 8
    input_state = 16
    output_action = 8

    params = init_policy_params(k_param, input_state, output_action)
    prepared = prepare_policy_params(params)  # one-time hoisted weight prep

    # 1) Small-batch Pallas path (single grid step, full-array blocks).
    state = jax.random.normal(k_state, (batch, input_state), jnp.float32)
    fwd = jax.jit(policy_nn_forward)
    actions = jax.block_until_ready(fwd(state, prepared))
    ref = _reference_forward(state, params)
    assert actions.shape == (batch, output_action)
    assert jnp.allclose(actions, ref, atol=1e-5, rtol=1e-5)

    # 2) Batched grid path: ragged last block, no host transpose / pad copies,
    #    lane-dense output writes.
    big_b = 300
    big_state = jax.random.normal(k_big, (big_b, input_state), jnp.float32)
    big_fwd = jax.jit(functools.partial(policy_nn_forward, batch_tile=128))
    big_actions = jax.block_until_ready(big_fwd(big_state, prepared))
    big_ref = _reference_forward(big_state, params)
    assert big_actions.shape == (big_b, output_action)
    assert jnp.allclose(big_actions, big_ref, atol=1e-5, rtol=1e-5)

    # 3) Lane-dense output flag (skips the trailing XLA transpose).
    t_actions = jax.block_until_ready(
        jax.jit(functools.partial(policy_nn_forward, transposed_output=True))(
            state, prepared))
    assert t_actions.shape == (output_action, batch)
    assert jnp.allclose(t_actions.T, ref, atol=1e-5, rtol=1e-5)

    # 4) bf16 streaming path (v6e/v7x recommendation: half the HBM traffic,
    #    f32 accumulation / biases / tanh) -- relaxed tolerance.
    prepared_bf16 = prepare_policy_params(params, compute_dtype=jnp.bfloat16)
    bf16_fwd = jax.jit(functools.partial(policy_nn_forward, batch_tile=128))
    bf16_actions = jax.block_until_ready(bf16_fwd(big_state, prepared_bf16))
    assert bf16_actions.shape == (big_b, output_action)
    assert jnp.allclose(bf16_actions, big_ref, atol=5e-2, rtol=5e-2)

    # 5) Tiny-batch XLA fast path (no pallas_call) matches too.
    fast = jax.block_until_ready(
        jax.jit(functools.partial(policy_nn_forward, min_pallas_batch=256))(
            state, prepared))
    assert jnp.allclose(fast, ref, atol=1e-5, rtol=1e-5)

    print("KERNEL_OK")
</pallas_src>

<mosaic_0001>
module attributes {stable_mosaic.version = 11 : i64} {
  func.func @_policy_mlp_kernel(%arg0: i32, %arg1: memref<8x16xf32, #tpu.memory_space<vmem>>, %arg2: memref<32x16xf32, #tpu.memory_space<vmem>>, %arg3: memref<32x1xf32, #tpu.memory_space<vmem>>, %arg4: memref<32x32xf32, #tpu.memory_space<vmem>>, %arg5: memref<32x1xf32, #tpu.memory_space<vmem>>, %arg6: memref<8x32xf32, #tpu.memory_space<vmem>>, %arg7: memref<8x1xf32, #tpu.memory_space<vmem>>, %arg8: memref<8x8xf32, #tpu.memory_space<vmem>>) attributes {dimension_semantics = [#tpu.dimension_semantics<parallel>], iteration_bounds = array<i64: 1>, scalar_prefetch = 0 : i64, scratch_operands = 0 : i64, tpu.core_type = #tpu.core_type<tc>, window_params = [{transform_indices = @transform_0, window_bounds = array<i64: 8, 16>}, {pipeline_mode = #tpu.pipeline_mode<synchronous>, transform_indices = @transform_1, window_bounds = array<i64: 32, 16>}, {pipeline_mode = #tpu.pipeline_mode<synchronous>, transform_indices = @transform_2, window_bounds = array<i64: 32, 1>}, {pipeline_mode = #tpu.pipeline_mode<synchronous>, transform_indices = @transform_3, window_bounds = array<i64: 32, 32>}, {pipeline_mode = #tpu.pipeline_mode<synchronous>, transform_indices = @transform_4, window_bounds = array<i64: 32, 1>}, {pipeline_mode = #tpu.pipeline_mode<synchronous>, transform_indices = @transform_5, window_bounds = array<i64: 8, 32>}, {pipeline_mode = #tpu.pipeline_mode<synchronous>, transform_indices = @transform_6, window_bounds = array<i64: 8, 1>}, {transform_indices = @transform_7, window_bounds = array<i64: 8, 8>}]} {
    %c0 = arith.constant 0 : index
    %c0_0 = arith.constant 0 : index
    %0 = vector.load %arg1[%c0, %c0_0] : memref<8x16xf32, #tpu.memory_space<vmem>>, vector<8x16xf32>
    %1 = tpu.transpose %0, [1, 0] : vector<8x16xf32> -> vector<16x8xf32>
    %c0_1 = arith.constant 0 : index
    %c0_2 = arith.constant 0 : index
    %2 = vector.load %arg2[%c0_1, %c0_2] : memref<32x16xf32, #tpu.memory_space<vmem>>, vector<32x16xf32>
    %cst = arith.constant dense<0.000000e+00> : vector<32x8xf32>
    %3 = tpu.matmul %2, %1, %cst {dimension_numbers = #tpu.dot_dimension_numbers<[1], [0], [0], [1], [0, 0, 1, 1], [], []>} : vector<32x16xf32>, vector<16x8xf32>, vector<32x8xf32> -> vector<32x8xf32>
    %c0_3 = arith.constant 0 : index
    %c0_4 = arith.constant 0 : index
    %4 = vector.load %arg3[%c0_3, %c0_4] : memref<32x1xf32, #tpu.memory_space<vmem>>, vector<32x1xf32>
    %5 = vector.broadcast %4 : vector<32x1xf32> to vector<32x8xf32>
    %6 = arith.addf %3, %5 : vector<32x8xf32>
    %cst_5 = arith.constant 0.000000e+00 : f32
    %7 = vector.broadcast %cst_5 : f32 to vector<32x8xf32>
    %8 = arith.maximumf %6, %7 : vector<32x8xf32>
    %c0_6 = arith.constant 0 : index
    %c0_7 = arith.constant 0 : index
    %9 = vector.load %arg4[%c0_6, %c0_7] : memref<32x32xf32, #tpu.memory_space<vmem>>, vector<32x32xf32>
    %cst_8 = arith.constant dense<0.000000e+00> : vector<32x8xf32>
    %10 = tpu.matmul %9, %8, %cst_8 {dimension_numbers = #tpu.dot_dimension_numbers<[1], [0], [0], [1], [0, 0, 1, 1], [], []>} : vector<32x32xf32>, vector<32x8xf32>, vector<32x8xf32> -> vector<32x8xf32>
    %c0_9 = arith.constant 0 : index
    %c0_10 = arith.constant 0 : index
    %11 = vector.load %arg5[%c0_9, %c0_10] : memref<32x1xf32, #tpu.memory_space<vmem>>, vector<32x1xf32>
    %12 = vector.broadcast %11 : vector<32x1xf32> to vector<32x8xf32>
    %13 = arith.addf %10, %12 : vector<32x8xf32>
    %cst_11 = arith.constant 0.000000e+00 : f32
    %14 = vector.broadcast %cst_11 : f32 to vector<32x8xf32>
    %15 = arith.maximumf %13, %14 : vector<32x8xf32>
    %c0_12 = arith.constant 0 : index
    %c0_13 = arith.constant 0 : index
    %16 = vector.load %arg6[%c0_12, %c0_13] : memref<8x32xf32, #tpu.memory_space<vmem>>, vector<8x32xf32>
    %cst_14 = arith.constant dense<0.000000e+00> : vector<8x8xf32>
    %17 = tpu.matmul %16, %15, %cst_14 {dimension_numbers = #tpu.dot_dimension_numbers<[1], [0], [0], [1], [0, 0, 1, 1], [], []>} : vector<8x32xf32>, vector<32x8xf32>, vector<8x8xf32> -> vector<8x8xf32>
    %c0_15 = arith.constant 0 : index
    %c0_16 = arith.constant 0 : index
    %18 = vector.load %arg7[%c0_15, %c0_16] : memref<8x1xf32, #tpu.memory_space<vmem>>, vector<8x1xf32>
    %19 = vector.broadcast %18 : vector<8x1xf32> to vector<8x8xf32>
    %20 = arith.addf %17, %19 : vector<8x8xf32>
    %21 = math.tanh %20 : vector<8x8xf32>
    %c0_17 = arith.constant 0 : index
    %c0_18 = arith.constant 0 : index
    %22 = vector.load %arg8[%c0_17, %c0_18] : memref<8x8xf32, #tpu.memory_space<vmem>>, vector<8x8xf32>
    tpu.vector_store %arg8[%c0_17, %c0_18], %21 {strides = array<i32>} : memref<8x8xf32, #tpu.memory_space<vmem>>, vector<8x8xf32>,
    return
  }
  func.func @transform_0(%arg0: i32) -> (i32, i32) {
    %c0_i32 = arith.constant 0 : i32
    %c0_i32_0 = arith.constant 0 : i32
    return %arg0, %c0_i32 : i32, i32
  }
  func.func @transform_1(%arg0: i32) -> (i32, i32) {
    %c0_i32 = arith.constant 0 : i32
    %c0_i32_0 = arith.constant 0 : i32
    %c0_i32_1 = arith.constant 0 : i32
    return %c0_i32, %c0_i32_0 : i32, i32
  }
  func.func @transform_2(%arg0: i32) -> (i32, i32) {
    %c0_i32 = arith.constant 0 : i32
    %c0_i32_0 = arith.constant 0 : i32
    %c0_i32_1 = arith.constant 0 : i32
    return %c0_i32, %c0_i32_0 : i32, i32
  }
  func.func @transform_3(%arg0: i32) -> (i32, i32) {
    %c0_i32 = arith.constant 0 : i32
    %c0_i32_0 = arith.constant 0 : i32
    %c0_i32_1 = arith.constant 0 : i32
    return %c0_i32, %c0_i32_0 : i32, i32
  }
  func.func @transform_4(%arg0: i32) -> (i32, i32) {
    %c0_i32 = arith.constant 0 : i32
    %c0_i32_0 = arith.constant 0 : i32
    %c0_i32_1 = arith.constant 0 : i32
    return %c0_i32, %c0_i32_0 : i32, i32
  }
  func.func @transform_5(%arg0: i32) -> (i32, i32) {
    %c0_i32 = arith.constant 0 : i32
    %c0_i32_0 = arith.constant 0 : i32
    %c0_i32_1 = arith.constant 0 : i32
    return %c0_i32, %c0_i32_0 : i32, i32
  }
  func.func @transform_6(%arg0: i32) -> (i32, i32) {
    %c0_i32 = arith.constant 0 : i32
    %c0_i32_0 = arith.constant 0 : i32
    %c0_i32_1 = arith.constant 0 : i32
    return %c0_i32, %c0_i32_0 : i32, i32
  }
  func.func @transform_7(%arg0: i32) -> (i32, i32) {
    %c0_i32 = arith.constant 0 : i32
    %c0_i32_0 = arith.constant 0 : i32
    return %c0_i32, %arg0 : i32, i32
  }
}

</mosaic_0001>

<llo_original>
// kernel: policy_nn_forward.1
$region0: #{policy_nn_forward.1}
  #allocation0 [shape = 'u32[]', space=smem, size = 0x4, offset = 0x4, fixed_abs, tag = 'smem constant byte address 0x4 - core index']
  #allocation1 [shape = 'u32[144,128]{1,0:T(1,128)}', space=vmem, size = 0x12000, scoped, tag = 'internal scratch']
  %s0 = inlined_call_operand.vmem [shape: f32[8,16], index: 0, kind: input, shape index: {}]
  %s1 = inlined_call_operand.vmem [shape: f32[32,16], index: 1, kind: input, shape index: {}]
  %s2 = inlined_call_operand.vmem [shape: f32[32,1], index: 2, kind: input, shape index: {}]
  %s3 = inlined_call_operand.vmem [shape: f32[32,32], index: 3, kind: input, shape index: {}]
  %s4 = inlined_call_operand.vmem [shape: f32[32,1], index: 4, kind: input, shape index: {}]
  %s5 = inlined_call_operand.vmem [shape: f32[8,32], index: 5, kind: input, shape index: {}]
  %s6 = inlined_call_operand.vmem [shape: f32[8,1], index: 6, kind: input, shape index: {}]
  %s7 = inlined_call_operand.vmem [shape: f32[8,8], index: 7, kind: output, shape index: {}]
  %s8 = sld [smem:[#allocation0]]
  $region38: #{policy_nn_forward.1} parent=0
    _
  %s10 = ssub.s32 1, %s8
  %s11 = scalar_select 0, %s10, %s8
  // Predicated region
  $region2: #{policy_nn_forward.1} parent=0 // pred_check
    _
  $region3: #{policy_nn_forward.1} parent=0 // pred_check_branch
    %13 = sbr.rel (0) target = $region5
  $region4: #{policy_nn_forward.1} parent=0 // pred_region
    _
  $region5: #{policy_nn_forward.1} parent=0 // pred_fallthru
    _
  // Predicated region
  $region6: #{policy_nn_forward.1} parent=0 // pred_check
    _
  $region7: #{policy_nn_forward.1} parent=0 // pred_check_branch
    %15 = sbr.rel (0) target = $region9
  $region8: #{policy_nn_forward.1} parent=0 // pred_region
    _
  $region9: #{policy_nn_forward.1} parent=0 // pred_fallthru
    _
  // Predicated region
  $region10: #{policy_nn_forward.1} parent=0 // pred_check
    _
  $region11: #{policy_nn_forward.1} parent=0 // pred_check_branch
    %17 = sbr.rel (0) target = $region13
  $region12: #{policy_nn_forward.1} parent=0 // pred_region
    _
  $region13: #{policy_nn_forward.1} parent=0 // pred_fallthru
    _
  // Predicated region
  $region14: #{policy_nn_forward.1} parent=0 // pred_check
    _
  $region15: #{policy_nn_forward.1} parent=0 // pred_check_branch
    %19 = sbr.rel (0) target = $region17
  $region16: #{policy_nn_forward.1} parent=0 // pred_region
    _
  $region17: #{policy_nn_forward.1} parent=0 // pred_fallthru
    _
  // Predicated region
  $region18: #{policy_nn_forward.1} parent=0 // pred_check
    _
  $region19: #{policy_nn_forward.1} parent=0 // pred_check_branch
    %21 = sbr.rel (0) target = $region21
  $region20: #{policy_nn_forward.1} parent=0 // pred_region
    _
  $region21: #{policy_nn_forward.1} parent=0 // pred_fallthru
    _
  // Predicated region
  $region22: #{policy_nn_forward.1} parent=0 // pred_check
    _
  $region23: #{policy_nn_forward.1} parent=0 // pred_check_branch
    %23 = sbr.rel (0) target = $region25
  $region24: #{policy_nn_forward.1} parent=0 // pred_region
    _
  $region25: #{policy_nn_forward.1} parent=0 // pred_fallthru
    _
  // Predicated region
  $region26: #{policy_nn_forward.1} parent=0 // pred_check
    _
  $region27: #{policy_nn_forward.1} parent=0 // pred_check_branch
    %25 = sbr.rel (0) target = $region29
  $region28: #{policy_nn_forward.1} parent=0 // pred_region
    _
  $region29: #{policy_nn_forward.1} parent=0 // pred_fallthru
    _
  %v26 = vld [vmem:[%s0] sm:$0xff]
  %v27 = vld [vmem:[%s1] sm:$0xff]
  %v28 = vld [vmem:[%s1 + $0x8] sm:$0xff]
  %v29 = vld [vmem:[%s1 + $0x10] sm:$0xff]
  %v30 = vld [vmem:[%s1 + $0x18] sm:$0xff]
  %v31 = vld [vmem:[%s2] sm:$0xff]
  %v32 = vld [vmem:[%s2 + $0x8] sm:$0xff]
  %v33 = vld [vmem:[%s2 + $0x10] sm:$0xff]
  %v34 = vld [vmem:[%s2 + $0x18] sm:$0xff]
  %36 = vset.pattern.permute.xlu0 0
  %37 = vperm.xlu0 %36, %v31
  %v38 = vpop.permute.xlu0 %37
  %41 = vset.pattern.permute.xlu0 0
  %42 = vperm.xlu0 %41, %v32
  %v43 = vpop.permute.xlu0 %42
  %46 = vset.pattern.permute.xlu0 0
  %47 = vperm.xlu0 %46, %v33
  %v48 = vpop.permute.xlu0 %47
  %51 = vset.pattern.permute.xlu0 0
  %52 = vperm.xlu0 %51, %v34
  %v53 = vpop.permute.xlu0 %52
  %vm55 = vcmask 130048
  %v57 = vsel %vm55, %v27, 0
  %v60 = vsel %vm55, %v28, 0
  %v63 = vsel %vm55, %v29, 0
  %v66 = vsel %vm55, %v30, 0
  %v69 = vsel %vm55, %v26, 0
  %71 = vmatprep.subr.mxu0 0.0
  %72 = vmatpush1.xpose.msra.mxu0 %v69
  %73 = vmatprep.subr.mxu0 0.0
  %74 = vmatpush1.xpose.msra.mxu0 0.0
  %75 = vmatprep.subr.mxu0 0.0
  %76 = vmatpush1.xpose.msra.mxu0 0.0
  %77 = vmatprep.subr.mxu0 0.0
  %78 = vmatpush1.xpose.msra.mxu0 0.0
  %79 = vmatprep.subr.mxu0 0.0
  %80 = vmatpush1.xpose.msra.mxu0 0.0
  %81 = vmatprep.subr.mxu0 0.0
  %82 = vmatpush1.xpose.msra.mxu0 0.0
  %83 = vmatprep.subr.mxu0 0.0
  %84 = vmatpush1.xpose.msra.mxu0 0.0
  %85 = vmatprep.subr.mxu0 0.0
  %86 = vmatpush1.xpose.msra.mxu0 0.0
  %87 = vmatprep.subr.mxu0 0.0
  %88 = vmatpush1.xpose.msra.mxu0 0.0
  %89 = vmatprep.subr.mxu0 0.0
  %90 = vmatpush1.xpose.msra.mxu0 0.0
  %91 = vmatprep.subr.mxu0 0.0
  %92 = vmatpush1.xpose.msra.mxu0 0.0
  %93 = vmatprep.subr.mxu0 0.0
  %94 = vmatpush1.xpose.msra.mxu0 0.0
  %95 = vmatprep.subr.mxu0 0.0
  %96 = vmatpush1.xpose.msra.mxu0 0.0
  %97 = vmatprep.subr.mxu0 0.0
  %98 = vmatpush1.xpose.msra.mxu0 0.0
  %99 = vmatprep.subr.mxu0 0.0
  %100 = vmatpush1.xpose.msra.mxu0 0.0
  %101 = vmatprep.subr.mxu0 0.0
  %102 = vmatpush1.xpose.msra.mxu0 0.0
  %103 = vmatprep.subr.mxu0 0.0
  %104 = vmatpush1.xpose.msra.mxu0 0.0
  %105 = vmatprep.subr.mxu0 0.0
  %106 = vmatpush1.xpose.msra.mxu0 0.0
  %107 = vmatprep.subr.mxu0 0.0
  %108 = vmatpush1.xpose.msra.mxu0 0.0
  %109 = vmatprep.subr.mxu0 0.0
  %110 = vmatpush1.xpose.msra.mxu0 0.0
  %111 = vmatprep.subr.mxu0 0.0
  %112 = vmatpush1.xpose.msra.mxu0 0.0
  %113 = vmatprep.subr.mxu0 0.0
  %114 = vmatpush1.xpose.msra.mxu0 0.0
  %115 = vmatprep.subr.mxu0 0.0
  %116 = vmatpush1.xpose.msra.mxu0 0.0
  %117 = vmatprep.subr.mxu0 0.0
  %118 = vmatpush1.xpose.msra.mxu0 0.0
  %119 = vmatprep.subr.mxu0 0.0
  %120 = vmatpush1.xpose.msra.mxu0 0.0
  %121 = vmatprep.subr.mxu0 0.0
  %122 = vmatpush1.xpose.msra.mxu0 0.0
  %123 = vmatprep.subr.mxu0 0.0
  %124 = vmatpush1.xpose.msra.mxu0 0.0
  %125 = vmatprep.subr.mxu0 0.0
  %126 = vmatpush1.xpose.msra.mxu0 0.0
  %127 = vmatprep.subr.mxu0 0.0
  %128 = vmatpush1.xpose.msra.mxu0 0.0
  %129 = vmatprep.subr.mxu0 0.0
  %130 = vmatpush1.xpose.msra.mxu0 0.0
  %131 = vmatprep.subr.mxu0 0.0
  %132 = vmatpush1.xpose.msra.mxu0 0.0
  %133 = vmatprep.subr.mxu0 0.0
  %134 = vmatpush1.xpose.msra.mxu0 0.0
  %135 = vmatprep.mubr.f32.mxu0 0.0
  %136 = vmatmul.mubr.f32.gmra.mrb[0].mxu0 %v57
  %v137 = vpop.f32.mrb[0].mxu0
  %v138 = vadd.f32 %v38, %v137
  %v139 = vpop.f32.mrb[0].mxu0
  %140 = vmatprep.mubr.f32.mxu0 0.0
  %141 = vmatmul.mubr.f32.gmra.mrb[0].mxu0 %v60
  %v142 = vpop.f32.mrb[0].mxu0
  %v143 = vadd.f32 %v43, %v142
  %v144 = vpop.f32.mrb[0].mxu0
  %145 = vmatprep.mubr.f32.mxu0 0.0
  %146 = vmatmul.mubr.f32.gmra.mrb[0].mxu0 %v63
  %v147 = vpop.f32.mrb[0].mxu0
  %v148 = vadd.f32 %v48, %v147
  %v149 = vpop.f32.mrb[0].mxu0
  %150 = vmatprep.mubr.f32.mxu0 0.0
  %151 = vmatmul.mubr.f32.gmra.mrb[0].mxu0 %v66
  %v152 = vpop.f32.mrb[0].mxu0
  %v153 = vadd.f32 %v53, %v152
  %v154 = vpop.f32.mrb[0].mxu0
  %155 = vdwg.mxu0
  %v156 = vmax.f32 %v138, 0.0
  %v157 = vmax.f32 %v143, 0.0
  %v158 = vmax.f32 %v148, 0.0
  %v159 = vmax.f32 %v153, 0.0
  %v160 = vld [vmem:[%s3] sm:$0xff]
  %v161 = vld [vmem:[%s3 + $0x8] sm:$0xff]
  %v162 = vld [vmem:[%s3 + $0x10] sm:$0xff]
  %v163 = vld [vmem:[%s3 + $0x18] sm:$0xff]
  %v164 = vld [vmem:[%s4] sm:$0xff]
  %v165 = vld [vmem:[%s4 + $0x8] sm:$0xff]
  %v166 = vld [vmem:[%s4 + $0x10] sm:$0xff]
  %v167 = vld [vmem:[%s4 + $0x18] sm:$0xff]
  %169 = vset.pattern.permute.xlu0 0
  %170 = vperm.xlu0 %169, %v164
  %v171 = vpop.permute.xlu0 %170
  %174 = vset.pattern.permute.xlu0 0
  %175 = vperm.xlu0 %174, %v165
  %v176 = vpop.permute.xlu0 %175
  %179 = vset.pattern.permute.xlu0 0
  %180 = vperm.xlu0 %179, %v166
  %v181 = vpop.permute.xlu0 %180
  %184 = vset.pattern.permute.xlu0 0
  %185 = vperm.xlu0 %184, %v167
  %v186 = vpop.permute.xlu0 %185
  %vm188 = vcmask 261120
  %v190 = vsel %vm188, %v160, 0
  %v193 = vsel %vm188, %v161, 0
  %v196 = vsel %vm188, %v162, 0
  %v199 = vsel %vm188, %v163, 0
  %201 = vmatprep.subr.mxu0 0.0
  %202 = vmatpush1.msra.mxu0 %v156
  %203 = vmatprep.subr.mxu0 0.0
  %204 = vmatpush1.msra.mxu0 %v157
  %205 = vmatprep.subr.mxu0 0.0
  %206 = vmatpush1.msra.mxu0 %v158
  %207 = vmatprep.subr.mxu0 0.0
  %208 = vmatpush1.msra.mxu0 %v159
  %209 = vmatprep.subr.mxu0 0.0
  %210 = vmatpush1.msra.mxu0 0.0
  %211 = vmatprep.subr.mxu0 0.0
  %212 = vmatpush1.msra.mxu0 0.0
  %213 = vmatprep.subr.mxu0 0.0
  %214 = vmatpush1.msra.mxu0 0.0
  %215 = vmatprep.subr.mxu0 0.0
  %216 = vmatpush1.msra.mxu0 0.0
  %217 = vmatprep.subr.mxu0 0.0
  %218 = vmatpush1.msra.mxu0 0.0
  %219 = vmatprep.subr.mxu0 0.0
  %220 = vmatpush1.msra.mxu0 0.0
  %221 = vmatprep.subr.mxu0 0.0
  %222 = vmatpush1.msra.mxu0 0.0
  %223 = vmatprep.subr.mxu0 0.0
  %224 = vmatpush1.msra.mxu0 0.0
  %225 = vmatprep.subr.mxu0 0.0
  %226 = vmatpush1.msra.mxu0 0.0
  %227 = vmatprep.subr.mxu0 0.0
  %228 = vmatpush1.msra.mxu0 0.0
  %229 = vmatprep.subr.mxu0 0.0
  %230 = vmatpush1.msra.mxu0 0.0
  %231 = vmatprep.subr.mxu0 0.0
  %232 = vmatpush1.msra.mxu0 0.0
  %233 = vmatprep.subr.mxu0 0.0
  %234 = vmatpush1.msra.mxu0 0.0
  %235 = vmatprep.subr.mxu0 0.0
  %236 = vmatpush1.msra.mxu0 0.0
  %237 = vmatprep.subr.mxu0 0.0
  %238 = vmatpush1.msra.mxu0 0.0
  %239 = vmatprep.subr.mxu0 0.0
  %240 = vmatpush1.msra.mxu0 0.0
  %241 = vmatprep.subr.mxu0 0.0
  %242 = vmatpush1.msra.mxu0 0.0
  %243 = vmatprep.subr.mxu0 0.0
  %244 = vmatpush1.msra.mxu0 0.0
  %245 = vmatprep.subr.mxu0 0.0
  %246 = vmatpush1.msra.mxu0 0.0
  %247 = vmatprep.subr.mxu0 0.0
  %248 = vmatpush1.msra.mxu0 0.0
  %249 = vmatprep.subr.mxu0 0.0
  %250 = vmatpush1.msra.mxu0 0.0
  %251 = vmatprep.subr.mxu0 0.0
  %252 = vmatpush1.msra.mxu0 0.0
  %253 = vmatprep.subr.mxu0 0.0
  %254 = vmatpush1.msra.mxu0 0.0
  %255 = vmatprep.subr.mxu0 0.0
  %256 = vmatpush1.msra.mxu0 0.0
  %257 = vmatprep.subr.mxu0 0.0
  %258 = vmatpush1.msra.mxu0 0.0
  %259 = vmatprep.subr.mxu0 0.0
  %260 = vmatpush1.msra.mxu0 0.0
  %261 = vmatprep.subr.mxu0 0.0
  %262 = vmatpush1.msra.mxu0 0.0
  %263 = vmatprep.subr.mxu0 0.0
  %264 = vmatpush1.msra.mxu0 0.0
  %265 = vmatprep.mubr.f32.mxu0 0.0
  %266 = vmatmul.mubr.f32.gmra.mrb[0].mxu0 %v190
  %v267 = vpop.f32.mrb[0].mxu0
  %v268 = vadd.f32 %v171, %v267
  %v269 = vpop.f32.mrb[0].mxu0
  %270 = vmatprep.mubr.f32.mxu0 0.0
  %271 = vmatmul.mubr.f32.gmra.mrb[0].mxu0 %v193
  %v272 = vpop.f32.mrb[0].mxu0
  %v273 = vadd.f32 %v176, %v272
  %v274 = vpop.f32.mrb[0].mxu0
  %275 = vmatprep.mubr.f32.mxu0 0.0
  %276 = vmatmul.mubr.f32.gmra.mrb[0].mxu0 %v196
  %v277 = vpop.f32.mrb[0].mxu0
  %v278 = vadd.f32 %v181, %v277
  %v279 = vpop.f32.mrb[0].mxu0
  %280 = vmatprep.mubr.f32.mxu0 0.0
  %281 = vmatmul.mubr.f32.gmra.mrb[0].mxu0 %v199
  %v282 = vpop.f32.mrb[0].mxu0
  %v283 = vadd.f32 %v186, %v282
  %v284 = vpop.f32.mrb[0].mxu0
  %285 = vdwg.mxu0
  %v286 = vmax.f32 %v268, 0.0
  %v287 = vmax.f32 %v273, 0.0
  %v288 = vmax.f32 %v278, 0.0
  %v289 = vmax.f32 %v283, 0.0
  %v290 = vld [vmem:[%s5] sm:$0xff]
  %v291 = vld [vmem:[%s6] sm:$0xff]
  %293 = vset.pattern.permute.xlu0 0
  %294 = vperm.xlu0 %293, %v291
  %v295 = vpop.permute.xlu0 %294
  %v298 = vsel %vm188, %v290, 0
  %300 = vmatprep.subr.mxu0 0.0
  %301 = vmatpush1.msra.mxu0 %v286
  %302 = vmatprep.subr.mxu0 0.0
  %303 = vmatpush1.msra.mxu0 %v287
  %304 = vmatprep.subr.mxu0 0.0
  %305 = vmatpush1.msra.mxu0 %v288
  %306 = vmatprep.subr.mxu0 0.0
  %307 = vmatpush1.msra.mxu0 %v289
  %308 = vmatprep.subr.mxu0 0.0
  %309 = vmatpush1.msra.mxu0 0.0
  %310 = vmatprep.subr.mxu0 0.0
  %311 = vmatpush1.msra.mxu0 0.0
  %312 = vmatprep.subr.mxu0 0.0
  %313 = vmatpush1.msra.mxu0 0.0
  %314 = vmatprep.subr.mxu0 0.0
  %315 = vmatpush1.msra.mxu0 0.0
  %316 = vmatprep.subr.mxu0 0.0
  %317 = vmatpush1.msra.mxu0 0.0
  %318 = vmatprep.subr.mxu0 0.0
  %319 = vmatpush1.msra.mxu0 0.0
  %320 = vmatprep.subr.mxu0 0.0
  %321 = vmatpush1.msra.mxu0 0.0
  %322 = vmatprep.subr.mxu0 0.0
  %323 = vmatpush1.msra.mxu0 0.0
  %324 = vmatprep.subr.mxu0 0.0
  %325 = vmatpush1.msra.mxu0 0.0
  %326 = vmatprep.subr.mxu0 0.0
  %327 = vmatpush1.msra.mxu0 0.0
  %328 = vmatprep.subr.mxu0 0.0
  %329 = vmatpush1.msra.mxu0 0.0
  %330 = vmatprep.subr.mxu0 0.0
  %331 = vmatpush1.msra.mxu0 0.0
  %332 = vmatprep.subr.mxu0 0.0
  %333 = vmatpush1.msra.mxu0 0.0
  %334 = vmatprep.subr.mxu0 0.0
  %335 = vmatpush1.msra.mxu0 0.0
  %336 = vmatprep.subr.mxu0 0.0
  %337 = vmatpush1.msra.mxu0 0.0
  %338 = vmatprep.subr.mxu0 0.0
  %339 = vmatpush1.msra.mxu0 0.0
  %340 = vmatprep.subr.mxu0 0.0
  %341 = vmatpush1.msra.mxu0 0.0
  %342 = vmatprep.subr.mxu0 0.0
  %343 = vmatpush1.msra.mxu0 0.0
  %344 = vmatprep.subr.mxu0 0.0
  %345 = vmatpush1.msra.mxu0 0.0
  %346 = vmatprep.subr.mxu0 0.0
  %347 = vmatpush1.msra.mxu0 0.0
  %348 = vmatprep.subr.mxu0 0.0
  %349 = vmatpush1.msra.mxu0 0.0
  %350 = vmatprep.subr.mxu0 0.0
  %351 = vmatpush1.msra.mxu0 0.0
  %352 = vmatprep.subr.mxu0 0.0
  %353 = vmatpush1.msra.mxu0 0.0
  %354 = vmatprep.subr.mxu0 0.0
  %355 = vmatpush1.msra.mxu0 0.0
  %356 = vmatprep.subr.mxu0 0.0
  %357 = vmatpush1.msra.mxu0 0.0
  %358 = vmatprep.subr.mxu0 0.0
  %359 = vmatpush1.msra.mxu0 0.0
  %360 = vmatprep.subr.mxu0 0.0
  %361 = vmatpush1.msra.mxu0 0.0
  %362 = vmatprep.subr.mxu0 0.0
  %363 = vmatpush1.msra.mxu0 0.0
  %364 = vmatprep.mubr.f32.mxu0 0.0
  %365 = vmatmul.mubr.f32.gmra.mrb[0].mxu0 %v298
  %v366 = vpop.f32.mrb[0].mxu0
  %v367 = vadd.f32 %v295, %v366
  %v368 = vpop.f32.mrb[0].mxu0
  %369 = vdwg.mxu0
  %v370 = vtanh.pop %v367
  %vm371 = vcmask 64512
  %372 = vst.msk [vmem:[%s7] sm:$0xff] %vm371, %v370
  // Predicated region
  $region30: #{policy_nn_forward.1} parent=0 // pred_check
    _
  $region31: #{policy_nn_forward.1} parent=0 // pred_check_branch
    %374 = sbr.rel (0) target = $region33
  $region32: #{policy_nn_forward.1} parent=0 // pred_region
    _
  $region33: #{policy_nn_forward.1} parent=0 // pred_fallthru
    _
  // Predicated region
  $region34: #{policy_nn_forward.1} parent=0 // pred_check
    _
  $region35: #{policy_nn_forward.1} parent=0 // pred_check_branch
    %376 = sbr.rel (0) target = $region37
  $region36: #{policy_nn_forward.1} parent=0 // pred_region
    _
  $region37: #{policy_nn_forward.1} parent=0 // pred_fallthru
    _

</llo_original>
